<compile_context>
chip_gen: v7x
topology: tpu7x:2x2x1
jax: 0.10.0
libtpu: 0.0.40
codegen_flags: <defaults>
</compile_context>

<pallas_src>
import functools

import jax
import jax.numpy as jnp
from jax.experimental import pallas as pl
from jax.experimental.pallas import tpu as pltpu

LANES = 128  # TPU lane width; fc3 is computed into a 128-lane slab, stored narrow.


def policy_net_kernel(x_ref, w1_ref, b1_ref, w3_ref, b3_ref, out_ref, *, action_dim):
    x = x_ref[...]                                   # (bm, obs_dim)  f32

    # ---- fc1 + ReLU on the MXU (K=obs_dim is tiny but the MXU slot is idle) ----
    h = jnp.maximum(
        jnp.dot(x, w1_ref[...], preferred_element_type=jnp.float32) + b1_ref[...],
        0.0,
    )                                                # (bm, hidden)

    # ---- fc3 on the MXU into a 128-lane padded slab ----
    logits = jnp.dot(h, w3_ref[...], preferred_element_type=jnp.float32)  # (bm, LANES)
    logits = logits + b3_ref[...]

    # Mask padded lanes to -inf so they do not perturb max / logsumexp.
    lane = jax.lax.broadcasted_iota(jnp.int32, logits.shape, 1)
    logits = jnp.where(lane < action_dim, logits, -jnp.inf)

    # ---- numerically stable log_softmax over the last axis ----
    m = jnp.max(logits, axis=-1, keepdims=True)
    z = logits - m
    lse = jnp.log(jnp.sum(jnp.exp(z), axis=-1, keepdims=True))

    # Narrow store: only the valid action lanes hit HBM (no -inf ever stored).
    out_ref[...] = z[:, :action_dim] - lse           # (bm, action_dim)


def policy_net_forward(state, w1, b1, w3, b3, *, block_b=2048):
    """state: (B, obs_dim) f32 -> log-probs (B, action_dim) f32.

    Weights stored transposed vs. torch: w1 (obs_dim, hidden), w3 (hidden, action_dim).
    """
    B, obs_dim = state.shape
    hidden = w1.shape[1]
    action_dim = w3.shape[1]

    # Pad fc3 weights/bias to a lane-dense (…, 128) slab for the in-kernel matmul.
    w3p = jnp.zeros((hidden, LANES), jnp.float32).at[:, :action_dim].set(w3)
    b3p = jnp.zeros((1, LANES), jnp.float32).at[:, :action_dim].set(b3.reshape(1, -1))
    b1 = b1.reshape(1, -1)

    # Batch tile: multiple of 8 sublanes, capped at block_b (VMEM-safe everywhere).
    bm = min(block_b, max(8, ((B + 7) // 8) * 8))
    bm = ((bm + 7) // 8) * 8
    n_blocks = pl.cdiv(B, bm)
    Bp = n_blocks * bm
    if Bp != B:
        state = jnp.pad(state, ((0, Bp - B), (0, 0)))

    kernel = functools.partial(policy_net_kernel, action_dim=action_dim)

    out = pl.pallas_call(
        kernel,
        out_shape=jax.ShapeDtypeStruct((Bp, action_dim), jnp.float32),
        grid=(n_blocks,),
        in_specs=[
            pl.BlockSpec((bm, obs_dim), lambda i: (i, 0)),       # state: tiled over batch
            pl.BlockSpec((obs_dim, hidden), lambda i: (0, 0)),   # w1: resident
            pl.BlockSpec((1, hidden), lambda i: (0, 0)),         # b1: resident
            pl.BlockSpec((hidden, LANES), lambda i: (0, 0)),     # w3 (padded): resident
            pl.BlockSpec((1, LANES), lambda i: (0, 0)),          # b3 (padded): resident
        ],
        out_specs=pl.BlockSpec((bm, action_dim), lambda i: (i, 0)),  # narrow output
        compiler_params=pltpu.CompilerParams(
            dimension_semantics=("parallel",),                   # 2 TCs on v7x
        ),
    )(state, w1, b1, w3p, b3p)

    return out if Bp == B else out[:B]


def init_params(key, observation_dim, action_dim, hidden=128):
    """Deterministic init mimicking torch.nn.Linear default (U(-1/sqrt(fan_in), +))."""
    k1, k2, k3, k4 = jax.random.split(key, 4)
    bnd1 = 1.0 / jnp.sqrt(observation_dim)
    bnd3 = 1.0 / jnp.sqrt(hidden)
    # Stored as (in_features, out_features) — transposed relative to torch's (out, in).
    w1 = jax.random.uniform(k1, (observation_dim, hidden), jnp.float32, -bnd1, bnd1)
    b1 = jax.random.uniform(k2, (1, hidden), jnp.float32, -bnd1, bnd1)
    w3 = jax.random.uniform(k3, (hidden, action_dim), jnp.float32, -bnd3, bnd3)
    b3 = jax.random.uniform(k4, (1, action_dim), jnp.float32, -bnd3, bnd3)
    return w1, b1, w3, b3


def _reference(state, w1, b1, w3, b3):
    h = jnp.maximum(state @ w1 + b1.reshape(1, -1), 0.0)
    return jax.nn.log_softmax(h @ w3 + b3.reshape(1, -1), axis=-1)


if __name__ == "__main__":
    # CartPole: observation_dim=4, action_dim=2.
    observation_dim, action_dim = 4, 2

    key = jax.random.PRNGKey(0)
    pkey, xkey1, xkey2 = jax.random.split(key, 3)
    w1, b1, w3, b3 = init_params(pkey, observation_dim, action_dim)

    # Small single-step batch (B=2). NOTE: at this size a Pallas kernel is pure
    # launch overhead — keep it for batched rollouts; this is a correctness demo.
    state_small = jax.random.normal(xkey1, (2, observation_dim), jnp.float32)
    out_small = policy_net_forward(state_small, w1, b1, w3, b3)
    jax.block_until_ready(out_small)
    ref_small = _reference(state_small, w1, b1, w3, b3)
    assert out_small.shape == (2, action_dim)
    assert jnp.allclose(out_small, ref_small, atol=1e-5), "mismatch (B=2)"

    # Multi-block batch (exercises grid tiling + batch padding), still small.
    state_big = jax.random.normal(xkey2, (40, observation_dim), jnp.float32)
    out_big = policy_net_forward(state_big, w1, b1, w3, b3, block_b=16)  # 3 grid blocks
    jax.block_until_ready(out_big)
    ref_big = _reference(state_big, w1, b1, w3, b3)
    assert out_big.shape == (40, action_dim)
    assert jnp.allclose(out_big, ref_big, atol=1e-5), "mismatch (B=40, tiled)"

    print("KERNEL_OK")
</pallas_src>

<mosaic_0001>
module attributes {stable_mosaic.version = 11 : i64} {
  func.func @policy_net_kernel(%arg0: i32, %arg1: memref<8x4xf32, #tpu.memory_space<vmem>>, %arg2: memref<4x128xf32, #tpu.memory_space<vmem>>, %arg3: memref<1x128xf32, #tpu.memory_space<vmem>>, %arg4: memref<128x128xf32, #tpu.memory_space<vmem>>, %arg5: memref<1x128xf32, #tpu.memory_space<vmem>>, %arg6: memref<8x2xf32, #tpu.memory_space<vmem>>) attributes {dimension_semantics = [#tpu.dimension_semantics<parallel>], iteration_bounds = array<i64: 1>, scalar_prefetch = 0 : i64, scratch_operands = 0 : i64, tpu.core_type = #tpu.core_type<tc>, window_params = [{transform_indices = @transform_0, window_bounds = array<i64: 8, 4>}, {pipeline_mode = #tpu.pipeline_mode<synchronous>, transform_indices = @transform_1, window_bounds = array<i64: 4, 128>}, {pipeline_mode = #tpu.pipeline_mode<synchronous>, transform_indices = @transform_2, window_bounds = array<i64: 1, 128>}, {pipeline_mode = #tpu.pipeline_mode<synchronous>, transform_indices = @transform_3, window_bounds = array<i64: 128, 128>}, {pipeline_mode = #tpu.pipeline_mode<synchronous>, transform_indices = @transform_4, window_bounds = array<i64: 1, 128>}, {transform_indices = @transform_5, window_bounds = array<i64: 8, 2>}]} {
    %c0 = arith.constant 0 : index
    %c0_0 = arith.constant 0 : index
    %0 = vector.load %arg1[%c0, %c0_0] : memref<8x4xf32, #tpu.memory_space<vmem>>, vector<8x4xf32>
    %c0_1 = arith.constant 0 : index
    %c0_2 = arith.constant 0 : index
    %1 = vector.load %arg2[%c0_1, %c0_2] : memref<4x128xf32, #tpu.memory_space<vmem>>, vector<4x128xf32>
    %cst = arith.constant dense<0.000000e+00> : vector<8x128xf32>
    %2 = tpu.matmul %0, %1, %cst {dimension_numbers = #tpu.dot_dimension_numbers<[1], [0], [0], [1], [0, 0, 1, 1], [], []>} : vector<8x4xf32>, vector<4x128xf32>, vector<8x128xf32> -> vector<8x128xf32>
    %c0_3 = arith.constant 0 : index
    %c0_4 = arith.constant 0 : index
    %3 = vector.load %arg3[%c0_3, %c0_4] : memref<1x128xf32, #tpu.memory_space<vmem>>, vector<1x128xf32>
    %4 = vector.broadcast %3 : vector<1x128xf32> to vector<8x128xf32>
    %5 = arith.addf %2, %4 : vector<8x128xf32>
    %cst_5 = arith.constant 0.000000e+00 : f32
    %6 = vector.broadcast %cst_5 : f32 to vector<8x128xf32>
    %7 = arith.maximumf %5, %6 : vector<8x128xf32>
    %c0_6 = arith.constant 0 : index
    %c0_7 = arith.constant 0 : index
    %8 = vector.load %arg4[%c0_6, %c0_7] : memref<128x128xf32, #tpu.memory_space<vmem>>, vector<128x128xf32>
    %cst_8 = arith.constant dense<0.000000e+00> : vector<8x128xf32>
    %9 = tpu.matmul %7, %8, %cst_8 {dimension_numbers = #tpu.dot_dimension_numbers<[1], [0], [0], [1], [0, 0, 1, 1], [], []>} : vector<8x128xf32>, vector<128x128xf32>, vector<8x128xf32> -> vector<8x128xf32>
    %c0_9 = arith.constant 0 : index
    %c0_10 = arith.constant 0 : index
    %10 = vector.load %arg5[%c0_9, %c0_10] : memref<1x128xf32, #tpu.memory_space<vmem>>, vector<1x128xf32>
    %11 = vector.broadcast %10 : vector<1x128xf32> to vector<8x128xf32>
    %12 = arith.addf %9, %11 : vector<8x128xf32>
    %13 = tpu.iota {dimensions = array<i32: 1>} : vector<8x128xi32>
    %c2_i32 = arith.constant 2 : i32
    %14 = vector.broadcast %c2_i32 : i32 to vector<8x128xi32>
    %15 = arith.cmpi slt, %13, %14 : vector<8x128xi32>
    %cst_11 = arith.constant 0xFF800000 : f32
    %16 = vector.broadcast %cst_11 : f32 to vector<8x128xf32>
    %17 = arith.select %15, %12, %16 : vector<8x128xi1>, vector<8x128xf32>
    %cst_12 = arith.constant dense<0xFF800000> : vector<8xf32>
    %18 = vector.multi_reduction <maximumf>, %17, %cst_12 [1] : vector<8x128xf32> to vector<8xf32>
    %19 = vector.shape_cast %18 : vector<8xf32> to vector<8x1xf32>
    %20 = vector.broadcast %19 : vector<8x1xf32> to vector<8x128xf32>
    %21 = arith.subf %17, %20 : vector<8x128xf32>
    %22 = math.exp %21 : vector<8x128xf32>
    %cst_13 = arith.constant dense<0.000000e+00> : vector<8xf32>
    %23 = vector.multi_reduction <add>, %22, %cst_13 [1] : vector<8x128xf32> to vector<8xf32>
    %24 = vector.shape_cast %23 : vector<8xf32> to vector<8x1xf32>
    %25 = math.log %24 : vector<8x1xf32>
    %26 = vector.extract_strided_slice %21 {offsets = [0, 0], sizes = [8, 2], strides = [1, 1]} : vector<8x128xf32> to vector<8x2xf32>
    %27 = vector.broadcast %25 : vector<8x1xf32> to vector<8x2xf32>
    %28 = arith.subf %26, %27 : vector<8x2xf32>
    %c0_14 = arith.constant 0 : index
    %c0_15 = arith.constant 0 : index
    %29 = vector.load %arg6[%c0_14, %c0_15] : memref<8x2xf32, #tpu.memory_space<vmem>>, vector<8x2xf32>
    tpu.vector_store %arg6[%c0_14, %c0_15], %28 {strides = array<i32>} : memref<8x2xf32, #tpu.memory_space<vmem>>, vector<8x2xf32>,
    return
  }
  func.func @transform_0(%arg0: i32) -> (i32, i32) {
    %c0_i32 = arith.constant 0 : i32
    %c0_i32_0 = arith.constant 0 : i32
    return %arg0, %c0_i32 : i32, i32
  }
  func.func @transform_1(%arg0: i32) -> (i32, i32) {
    %c0_i32 = arith.constant 0 : i32
    %c0_i32_0 = arith.constant 0 : i32
    %c0_i32_1 = arith.constant 0 : i32
    return %c0_i32, %c0_i32_0 : i32, i32
  }
  func.func @transform_2(%arg0: i32) -> (i32, i32) {
    %c0_i32 = arith.constant 0 : i32
    %c0_i32_0 = arith.constant 0 : i32
    %c0_i32_1 = arith.constant 0 : i32
    return %c0_i32, %c0_i32_0 : i32, i32
  }
  func.func @transform_3(%arg0: i32) -> (i32, i32) {
    %c0_i32 = arith.constant 0 : i32
    %c0_i32_0 = arith.constant 0 : i32
    %c0_i32_1 = arith.constant 0 : i32
    return %c0_i32, %c0_i32_0 : i32, i32
  }
  func.func @transform_4(%arg0: i32) -> (i32, i32) {
    %c0_i32 = arith.constant 0 : i32
    %c0_i32_0 = arith.constant 0 : i32
    %c0_i32_1 = arith.constant 0 : i32
    return %c0_i32, %c0_i32_0 : i32, i32
  }
  func.func @transform_5(%arg0: i32) -> (i32, i32) {
    %c0_i32 = arith.constant 0 : i32
    %c0_i32_0 = arith.constant 0 : i32
    return %arg0, %c0_i32 : i32, i32
  }
}

</mosaic_0001>

<llo_original>
// kernel: tpu_custom_call.1
$region0: #{tpu_custom_call.1}
  #allocation0 [shape = 'u32[]', space=smem, size = 0x4, offset = 0x4, fixed_abs, tag = 'smem constant byte address 0x4 - core index']
  #allocation1 [shape = 'u32[144,128]{1,0:T(1,128)}', space=vmem, size = 0x12000, scoped, tag = 'internal scratch']
  %s0 = inlined_call_operand.vmem [shape: f32[8,4], index: 0, kind: input, shape index: {}]
  %s1 = inlined_call_operand.vmem [shape: f32[4,128], index: 1, kind: input, shape index: {}]
  %s2 = inlined_call_operand.vmem [shape: f32[1,128], index: 2, kind: input, shape index: {}]
  %s3 = inlined_call_operand.hbm [shape: f32[128,128], index: 3, kind: input, shape index: {}]
  %s4 = inlined_call_operand.vmem [shape: f32[1,128], index: 4, kind: input, shape index: {}]
  %s5 = inlined_call_operand.vmem [shape: f32[8,2], index: 5, kind: output, shape index: {}]
  %s6 = sld [smem:[#allocation0]]
  $region34: #{tpu_custom_call.1} parent=0
    _
  %s8 = ssub.s32 1, %s6
  %s9 = scalar_select 0, %s8, %s6
  $region1: #{tpu_custom_call.1} parent=0
    #allocation2 [shape = 'u8[65536]{0}', space=vmem, size = 0x10000, scoped, tag = 'input window, operand 3, single buffered']
    #allocation3 [shape = 's32[1]{0}', space=sflag, size = 0x4, scoped, tag = 'scoped memory for tpu_custom_call.1']
    %10 = vsyncpa [#allocation3], 0
    // Predicated region
    $region2: #{tpu_custom_call.1} parent=1 // pred_check
      _
    $region3: #{tpu_custom_call.1} parent=1 // pred_check_branch
      %12 = sbr.rel (0) target = $region5
    $region4: #{tpu_custom_call.1} parent=1 // pred_region
      _
    $region5: #{tpu_custom_call.1} parent=1 // pred_fallthru
      _
    // Predicated region
    $region6: #{tpu_custom_call.1} parent=1 // pred_check
      _
    $region7: #{tpu_custom_call.1} parent=1 // pred_check_branch
      %14 = sbr.rel (0) target = $region9
    $region8: #{tpu_custom_call.1} parent=1 // pred_region
      _
    $region9: #{tpu_custom_call.1} parent=1 // pred_fallthru
      _
    // Predicated region
    $region10: #{tpu_custom_call.1} parent=1 // pred_check
      _
    $region11: #{tpu_custom_call.1} parent=1 // pred_check_branch
      %16 = sbr.rel (0) target = $region13
    $region12: #{tpu_custom_call.1} parent=1 // pred_region
      _
    $region13: #{tpu_custom_call.1} parent=1 // pred_fallthru
      _
    // Predicated region
    $region14: #{tpu_custom_call.1} parent=1 // pred_check
      _
    $region15: #{tpu_custom_call.1} parent=1 // pred_check_branch
      %18 = sbr.rel (0) target = $region17
    $region16: #{tpu_custom_call.1} parent=1 // pred_region
      %s20 = ssub.s32 2048, 2048
      %21 = vsyncadd [#allocation3], %s20
      %s22 = sshll.u32 [#allocation2], 4
      %s23 = int_to_ptr.vmem [resolvable:$true] %s22
      %28 = dma.hbm_to_vmem [thread:$0]  %s3, 2048, %s23, [#allocation3], 128, 128, 8
    $region17: #{tpu_custom_call.1} parent=1 // pred_fallthru
      _
    // Predicated region
    $region18: #{tpu_custom_call.1} parent=1 // pred_check
      _
    $region19: #{tpu_custom_call.1} parent=1 // pred_check_branch
      %30 = sbr.rel (0) target = $region21
    $region20: #{tpu_custom_call.1} parent=1 // pred_region
      _
    $region21: #{tpu_custom_call.1} parent=1 // pred_fallthru
      _
    // Predicated region
    $region22: #{tpu_custom_call.1} parent=1 // pred_check
      _
    $region23: #{tpu_custom_call.1} parent=1 // pred_check_branch
      %32 = sbr.rel (0) target = $region25
    $region24: #{tpu_custom_call.1} parent=1 // pred_region
      %33 = dma.done [#allocation3], 2048
    $region25: #{tpu_custom_call.1} parent=1 // pred_fallthru
      _
    %v34 = vld [vmem:[%s0] sm:$0xff]
    %v35 = vld [vmem:[%s1] sm:$0xf]
    %v36 = vld [vmem:[%s2] sm:$0x1]
    %v38 = vlaneseq
    %v39 = vshrl.u32 %v38, 7
    %v40 = vsub.s32 0, %v39
    %v41 = vrot.slane %v36, %v40
    %vm43 = vcmask 31744
    %v45 = vsel %vm43, %v34, 0
    %vm47 = vcmask 1043456
    %v49 = vsel %vm47, %v35, 0
    %51 = vmatprep.subr.mxu0 0.0
    %52 = vmatpush1.msra.mxu0 %v49
    %53 = vmatprep.subr.mxu0 0.0
    %54 = vmatpush1.msra.mxu0 0.0
    %55 = vmatprep.subr.mxu0 0.0
    %56 = vmatpush1.msra.mxu0 0.0
    %57 = vmatprep.subr.mxu0 0.0
    %58 = vmatpush1.msra.mxu0 0.0
    %59 = vmatprep.subr.mxu0 0.0
    %60 = vmatpush1.msra.mxu0 0.0
    %61 = vmatprep.subr.mxu0 0.0
    %62 = vmatpush1.msra.mxu0 0.0
    %63 = vmatprep.subr.mxu0 0.0
    %64 = vmatpush1.msra.mxu0 0.0
    %65 = vmatprep.subr.mxu0 0.0
    %66 = vmatpush1.msra.mxu0 0.0
    %67 = vmatprep.subr.mxu0 0.0
    %68 = vmatpush1.msra.mxu0 0.0
    %69 = vmatprep.subr.mxu0 0.0
    %70 = vmatpush1.msra.mxu0 0.0
    %71 = vmatprep.subr.mxu0 0.0
    %72 = vmatpush1.msra.mxu0 0.0
    %73 = vmatprep.subr.mxu0 0.0
    %74 = vmatpush1.msra.mxu0 0.0
    %75 = vmatprep.subr.mxu0 0.0
    %76 = vmatpush1.msra.mxu0 0.0
    %77 = vmatprep.subr.mxu0 0.0
    %78 = vmatpush1.msra.mxu0 0.0
    %79 = vmatprep.subr.mxu0 0.0
    %80 = vmatpush1.msra.mxu0 0.0
    %81 = vmatprep.subr.mxu0 0.0
    %82 = vmatpush1.msra.mxu0 0.0
    %83 = vmatprep.subr.mxu0 0.0
    %84 = vmatpush1.msra.mxu0 0.0
    %85 = vmatprep.subr.mxu0 0.0
    %86 = vmatpush1.msra.mxu0 0.0
    %87 = vmatprep.subr.mxu0 0.0
    %88 = vmatpush1.msra.mxu0 0.0
    %89 = vmatprep.subr.mxu0 0.0
    %90 = vmatpush1.msra.mxu0 0.0
    %91 = vmatprep.subr.mxu0 0.0
    %92 = vmatpush1.msra.mxu0 0.0
    %93 = vmatprep.subr.mxu0 0.0
    %94 = vmatpush1.msra.mxu0 0.0
    %95 = vmatprep.subr.mxu0 0.0
    %96 = vmatpush1.msra.mxu0 0.0
    %97 = vmatprep.subr.mxu0 0.0
    %98 = vmatpush1.msra.mxu0 0.0
    %99 = vmatprep.subr.mxu0 0.0
    %100 = vmatpush1.msra.mxu0 0.0
    %101 = vmatprep.subr.mxu0 0.0
    %102 = vmatpush1.msra.mxu0 0.0
    %103 = vmatprep.subr.mxu0 0.0
    %104 = vmatpush1.msra.mxu0 0.0
    %105 = vmatprep.subr.mxu0 0.0
    %106 = vmatpush1.msra.mxu0 0.0
    %107 = vmatprep.subr.mxu0 0.0
    %108 = vmatpush1.msra.mxu0 0.0
    %109 = vmatprep.subr.mxu0 0.0
    %110 = vmatpush1.msra.mxu0 0.0
    %111 = vmatprep.subr.mxu0 0.0
    %112 = vmatpush1.msra.mxu0 0.0
    %113 = vmatprep.subr.mxu0 0.0
    %114 = vmatpush1.msra.mxu0 0.0
    %115 = vmatprep.mubr.f32.mxu0 0.0
    %116 = vmatmul.mubr.f32.gmra.mrb[0].mxu0 %v45
    %v117 = vpop.f32.mrb[0].mxu0
    %v118 = vadd.f32 %v41, %v117
    %v119 = vpop.f32.mrb[0].mxu0
    %120 = vdwg.mxu0
    %v121 = vmax.f32 %v118, 0.0
    %v122 = vld [vmem:[#allocation2] sm:$0xff]
    %v123 = vld [vmem:[#allocation2 + $0x8] sm:$0xff]
    %v124 = vld [vmem:[#allocation2 + $0x10] sm:$0xff]
    %v125 = vld [vmem:[#allocation2 + $0x18] sm:$0xff]
    %v126 = vld [vmem:[#allocation2 + $0x20] sm:$0xff]
    %v127 = vld [vmem:[#allocation2 + $0x28] sm:$0xff]
    %v128 = vld [vmem:[#allocation2 + $0x30] sm:$0xff]
    %v129 = vld [vmem:[#allocation2 + $0x38] sm:$0xff]
    %v130 = vld [vmem:[#allocation2 + $0x40] sm:$0xff]
    %v131 = vld [vmem:[#allocation2 + $0x48] sm:$0xff]
    %v132 = vld [vmem:[#allocation2 + $0x50] sm:$0xff]
    %v133 = vld [vmem:[#allocation2 + $0x58] sm:$0xff]
    %v134 = vld [vmem:[#allocation2 + $0x60] sm:$0xff]
    %v135 = vld [vmem:[#allocation2 + $0x68] sm:$0xff]
    %v136 = vld [vmem:[#allocation2 + $0x70] sm:$0xff]
    %v137 = vld [vmem:[#allocation2 + $0x78] sm:$0xff]
    %v138 = vld [vmem:[%s4] sm:$0x1]
    %v140 = vlaneseq
    %v141 = vshrl.u32 %v140, 7
    %v142 = vsub.s32 0, %v141
    %v143 = vrot.slane %v138, %v142
    %145 = vmatprep.subr.mxu0 0.0
    %146 = vmatpush1.msra.mxu0 %v122
    %147 = vmatprep.subr.mxu0 0.0
    %148 = vmatpush1.msra.mxu0 %v123
    %149 = vmatprep.subr.mxu0 0.0
    %150 = vmatpush1.msra.mxu0 %v124
    %151 = vmatprep.subr.mxu0 0.0
    %152 = vmatpush1.msra.mxu0 %v125
    %153 = vmatprep.subr.mxu0 0.0
    %154 = vmatpush1.msra.mxu0 %v126
    %155 = vmatprep.subr.mxu0 0.0
    %156 = vmatpush1.msra.mxu0 %v127
    %157 = vmatprep.subr.mxu0 0.0
    %158 = vmatpush1.msra.mxu0 %v128
    %159 = vmatprep.subr.mxu0 0.0
    %160 = vmatpush1.msra.mxu0 %v129
    %161 = vmatprep.subr.mxu0 0.0
    %162 = vmatpush1.msra.mxu0 %v130
    %163 = vmatprep.subr.mxu0 0.0
    %164 = vmatpush1.msra.mxu0 %v131
    %165 = vmatprep.subr.mxu0 0.0
    %166 = vmatpush1.msra.mxu0 %v132
    %167 = vmatprep.subr.mxu0 0.0
    %168 = vmatpush1.msra.mxu0 %v133
    %169 = vmatprep.subr.mxu0 0.0
    %170 = vmatpush1.msra.mxu0 %v134
    %171 = vmatprep.subr.mxu0 0.0
    %172 = vmatpush1.msra.mxu0 %v135
    %173 = vmatprep.subr.mxu0 0.0
    %174 = vmatpush1.msra.mxu0 %v136
    %175 = vmatprep.subr.mxu0 0.0
    %176 = vmatpush1.msra.mxu0 %v137
    %177 = vmatprep.subr.mxu0 0.0
    %178 = vmatpush1.msra.mxu0 0.0
    %179 = vmatprep.subr.mxu0 0.0
    %180 = vmatpush1.msra.mxu0 0.0
    %181 = vmatprep.subr.mxu0 0.0
    %182 = vmatpush1.msra.mxu0 0.0
    %183 = vmatprep.subr.mxu0 0.0
    %184 = vmatpush1.msra.mxu0 0.0
    %185 = vmatprep.subr.mxu0 0.0
    %186 = vmatpush1.msra.mxu0 0.0
    %187 = vmatprep.subr.mxu0 0.0
    %188 = vmatpush1.msra.mxu0 0.0
    %189 = vmatprep.subr.mxu0 0.0
    %190 = vmatpush1.msra.mxu0 0.0
    %191 = vmatprep.subr.mxu0 0.0
    %192 = vmatpush1.msra.mxu0 0.0
    %193 = vmatprep.subr.mxu0 0.0
    %194 = vmatpush1.msra.mxu0 0.0
    %195 = vmatprep.subr.mxu0 0.0
    %196 = vmatpush1.msra.mxu0 0.0
    %197 = vmatprep.subr.mxu0 0.0
    %198 = vmatpush1.msra.mxu0 0.0
    %199 = vmatprep.subr.mxu0 0.0
    %200 = vmatpush1.msra.mxu0 0.0
    %201 = vmatprep.subr.mxu0 0.0
    %202 = vmatpush1.msra.mxu0 0.0
    %203 = vmatprep.subr.mxu0 0.0
    %204 = vmatpush1.msra.mxu0 0.0
    %205 = vmatprep.subr.mxu0 0.0
    %206 = vmatpush1.msra.mxu0 0.0
    %207 = vmatprep.subr.mxu0 0.0
    %208 = vmatpush1.msra.mxu0 0.0
    %209 = vmatprep.mubr.f32.mxu0 0.0
    %210 = vmatmul.mubr.f32.gmra.mrb[0].mxu0 %v121
    %v211 = vpop.f32.mrb[0].mxu0
    %v212 = vadd.f32 %v143, %v211
    %v213 = vpop.f32.mrb[0].mxu0
    %214 = vdwg.mxu0
    %v215 = vlaneseq
    %v216 = vand.u32 %v215, 127
    %vm217 = vcmp.lt.s32.totalorder %v216, 2
    %v218 = vsel %vm217, %v212, -inf
    %219 = vmax.xlane.f32.xlu0 %v218
    %v220 = vpop.xlane.xlu0 %219
    %v221 = vsub.f32 %v218, %v220
    %v222 = vmul.f32 %v221, 1.442695
    %v223 = vpow.pop %v222
    %224 = vadd.xlane.f32.xlu0 %v223
    %v225 = vpop.xlane.xlu0 %224
    %v226 = vlog2.pop %v225
    %v227 = vmul.f32 %v226, 0.6931472
    %v228 = vsub.f32 %v221, %v227
    %vm229 = vcmask 15360
    %230 = vst.msk [vmem:[%s5] sm:$0xff] %vm229, %v228
    // Predicated region
    $region26: #{tpu_custom_call.1} parent=1 // pred_check
      _
    $region27: #{tpu_custom_call.1} parent=1 // pred_check_branch
      %232 = sbr.rel (0) target = $region29
    $region28: #{tpu_custom_call.1} parent=1 // pred_region
      _
    $region29: #{tpu_custom_call.1} parent=1 // pred_fallthru
      _
    // Predicated region
    $region30: #{tpu_custom_call.1} parent=1 // pred_check
      _
    $region31: #{tpu_custom_call.1} parent=1 // pred_check_branch
      %234 = sbr.rel (0) target = $region33
    $region32: #{tpu_custom_call.1} parent=1 // pred_region
      _
    $region33: #{tpu_custom_call.1} parent=1 // pred_fallthru
      _
    %235 = vsyncpa [#allocation3], 1

</llo_original>
